<compile_context>
chip_gen: v7x
topology: tpu7x:2x2x1
jax: 0.10.0
libtpu: 0.0.40
codegen_flags: <defaults>
</compile_context>

<pallas_src>
import functools

import jax
import jax.numpy as jnp
from jax.experimental import pallas as pl
from jax.experimental.pallas import tpu as pltpu


def _round_up(x, m):
    return (x + m - 1) // m * m


def _ceil_div(a, b):
    return -(-a // b)


def _choose_batch_tiling(B, batch_tile):
    """Split B into n_steps tiles of TB rows each, minimizing padding waste."""
    n_steps = max(_ceil_div(B, batch_tile), 1)
    # Keep >= 2 (and even) grid steps for large batches so the "parallel" grid
    # axis can be sharded across both v7x TensorCores; the extra ~0.35 us step
    # is negligible on single-TC generations.
    if n_steps == 1 and B >= 512:
        n_steps = 2
    if n_steps > 1 and n_steps % 2:
        n_steps += 1
    # 32-row granule: satisfies the int8 sublane tile for the id stream and the
    # 8-row granule for the f32 streams.
    tb = _round_up(_ceil_div(B, n_steps), 32)
    return tb, tb * n_steps, n_steps


def _secret_extractor_kernel(ids_ref, keyf_ref, emb_lw_ref, w_seq_ref,
                             w_key_ref, b_ref, out_ref, *, num_classes):
    # ids: [TB, L] int8 token ids (widened on the VPU); keyf: [TB, K*V1] f32.
    ids = ids_ref[...].astype(jnp.int32)

    # Tiny-vocab (V1 = 8) gather emb_lw[ids] as an unrolled compare/select chain
    # against SMEM scalars.  Out-of-range ids contribute 0 (one-hot semantics).
    # (A 3-level bit-select tree would shave ~35% of the VALU ops, but this
    #  kernel is bandwidth / step-overhead bound, so the simple chain stays.)
    s_seq = jnp.zeros(ids.shape, jnp.float32)
    for v in range(num_classes):
        s_seq = jnp.where(ids == v, emb_lw_ref[v], s_seq)

    # out = s_seq @ W_seq + key_flat @ W_key_eff + b_eff   (M = TB on the MXU)
    out = (jnp.dot(s_seq, w_seq_ref[...], preferred_element_type=jnp.float32)
           + jnp.dot(keyf_ref[...], w_key_ref[...],
                     preferred_element_type=jnp.float32)
           + b_ref[...])
    out_ref[...] = jax.nn.sigmoid(out)


def secret_extractor(sec_seq, key, params, *, batch_tile=2048,
                     vmem_limit_bytes=None):
    """sec_seq: int [B, L] token ids; key: f32 [B, K, V1]; params as in the torch module.

    batch_tile is the per-grid-step batch tile upper bound (sweepable knob);
    2048 fits every generation's default scoped-VMEM limit.  Pass
    vmem_limit_bytes to raise the Mosaic scoped-VMEM limit for larger tiles.
    """
    emb, kw, kb, lw, lb, l1w, l1b = params
    B, L = sec_seq.shape
    _, K, V1 = key.shape
    S = l1w.shape[1]
    assert l1w.shape[0] == L + K, "linear1 expects L + K == 41 features"

    # ---- constant-fold Linear(E -> 1) through the upstream weights (wrapper) ----
    lw_vec = lw[0].astype(jnp.float32)                       # [E]
    emb_lw = (emb @ lw_vec).astype(jnp.float32)              # [V1]   emb row . lw
    kw_lw = kw @ lw_vec                                      # [V1]   (key W^T) . lw
    kb_lw = jnp.sum(kb[0] * lw_vec)                          # scalar  kb . lw
    w_seq = l1w[:L].astype(jnp.float32)                      # [L, S]
    l1w_key = l1w[L:]                                        # [K, S]
    w_key = (kw_lw[None, :, None] * l1w_key[:, None, :]).reshape(K * V1, S)  # [K*V1, S]
    b_eff = (l1b
             + lb[0, 0] * jnp.sum(l1w, axis=0, keepdims=True)
             + kb_lw * jnp.sum(l1w_key, axis=0, keepdims=True))              # [1, S]

    ids = sec_seq.astype(jnp.int8)                           # values < V1 = 8
    key_flat = key.reshape(B, K * V1).astype(jnp.float32)    # [B, K*V1]

    # ---- padding-minimizing batch tiling ----
    TB, B_pad, n_steps = _choose_batch_tiling(B, batch_tile)
    if B_pad != B:
        ids = jnp.pad(ids, ((0, B_pad - B), (0, 0)))
        key_flat = jnp.pad(key_flat, ((0, B_pad - B), (0, 0)))

    kernel = functools.partial(_secret_extractor_kernel, num_classes=V1)
    whole = lambda i: (0, 0)

    out = pl.pallas_call(
        kernel,
        out_shape=jax.ShapeDtypeStruct((B_pad, S), jnp.float32),
        grid_spec=pltpu.PrefetchScalarGridSpec(
            num_scalar_prefetch=0,
            grid=(n_steps,),
            in_specs=[
                pl.BlockSpec((TB, L), lambda i: (i, 0)),              # int8 token ids
                pl.BlockSpec((TB, K * V1), lambda i: (i, 0)),         # key (flattened)
                pl.BlockSpec(memory_space=pltpu.MemorySpace.SMEM),    # emb_lw scalars
                pl.BlockSpec((L, S), whole),                          # W_seq
                pl.BlockSpec((K * V1, S), whole),                     # W_key_eff
                pl.BlockSpec((1, S), whole),                          # folded bias
            ],
            out_specs=pl.BlockSpec((TB, S), lambda i: (i, 0)),
        ),
        compiler_params=pltpu.CompilerParams(
            dimension_semantics=("parallel",),
            vmem_limit_bytes=vmem_limit_bytes),
    )(ids, key_flat, emb_lw, w_seq, w_key, b_eff)
    return out[:B]


def secret_extractor_ref(sec_seq, key, params):
    """Pure-JAX reference with the ORIGINAL (un-folded) math."""
    emb, kw, kb, lw, lb, l1w, l1b = params
    seq_emd = emb[sec_seq]                                   # [B, L, E]
    key_emd = key @ kw + kb                                  # [B, K, E]
    feat = jnp.concatenate([seq_emd, key_emd], axis=1)       # [B, 41, E]
    s = jnp.sum(feat * lw, axis=-1) + lb[0, 0]               # [B, 41]
    out = s @ l1w + l1b                                      # [B, S]
    return jax.nn.sigmoid(out)


if __name__ == "__main__":
    # Module-consistent small shapes: vocab_size=7 (V1=8), E=32, secret_size=16,
    # sec_seq length 33 + key length 8 == 41 (required by Linear(41, secret_size)).
    L, K = 33, 8
    vocab_size = 7
    V1 = vocab_size + 1
    E = 32
    S = 16

    root = jax.random.PRNGKey(0)
    ks = jax.random.split(root, 12)

    emb = jax.random.normal(ks[0], (V1, E), jnp.float32)                       # sec_embed.weight
    kw = jax.random.normal(ks[1], (V1, E), jnp.float32) / jnp.sqrt(V1)         # key_embed.weight^T
    kb = jax.random.normal(ks[2], (1, E), jnp.float32) * 0.01                  # key_embed.bias
    lw = jax.random.normal(ks[3], (1, E), jnp.float32) * jnp.sqrt(2.0 / E)     # linear.weight
    lb = jax.random.normal(ks[4], (1, 1), jnp.float32) * 0.01                  # linear.bias
    l1w = jax.random.normal(ks[5], (L + K, S), jnp.float32) * jnp.sqrt(2.0 / (L + K))  # linear1.weight^T
    l1b = jax.random.normal(ks[6], (1, S), jnp.float32) * 0.01                 # linear1.bias
    params = (emb, kw, kb, lw, lb, l1w, l1b)

    def check(B, kid, kkey):
        sec_seq = jax.random.randint(kid, (B, L), 0, V1)
        key_in = jax.random.normal(kkey, (B, K, V1), jnp.float32)
        out = jax.block_until_ready(secret_extractor(sec_seq, key_in, params))
        ref = secret_extractor_ref(sec_seq, key_in, params)
        assert out.shape == (B, S)
        err = jnp.max(jnp.abs(out - ref))
        assert jnp.allclose(out, ref, rtol=1e-4, atol=5e-5), (
            f"B={B}: max abs err = {err}")

    # Tiny batch: single 32-row tile, grid=(1,), exercises batch padding.
    check(2, ks[7], ks[8])
    # Mid batch: forced to 2 even steps (v7x two-TC heuristic), TB=320.
    check(600, ks[9], ks[10])
    # Larger batch: multi-step grid (4 even steps), padding-minimizing TB.
    check(4500, ks[11], ks[7])

    print("KERNEL_OK")
</pallas_src>

<mosaic_0001>
module attributes {stable_mosaic.version = 11 : i64} {
  func.func @_secret_extractor_kernel(%arg0: i32, %arg1: memref<32x33xi8, #tpu.memory_space<vmem>>, %arg2: memref<32x64xf32, #tpu.memory_space<vmem>>, %arg3: memref<8xf32, #tpu.memory_space<smem>>, %arg4: memref<33x16xf32, #tpu.memory_space<vmem>>, %arg5: memref<64x16xf32, #tpu.memory_space<vmem>>, %arg6: memref<1x16xf32, #tpu.memory_space<vmem>>, %arg7: memref<32x16xf32, #tpu.memory_space<vmem>>) attributes {dimension_semantics = [#tpu.dimension_semantics<parallel>], iteration_bounds = array<i64: 1>, scalar_prefetch = 0 : i64, scratch_operands = 0 : i64, tpu.core_type = #tpu.core_type<tc>, window_params = [{transform_indices = @transform_0, window_bounds = array<i64: 32, 33>}, {transform_indices = @transform_1, window_bounds = array<i64: 32, 64>}, {transform_indices = @transform_2, window_bounds = array<i64: 8>}, {pipeline_mode = #tpu.pipeline_mode<synchronous>, transform_indices = @transform_3, window_bounds = array<i64: 33, 16>}, {pipeline_mode = #tpu.pipeline_mode<synchronous>, transform_indices = @transform_4, window_bounds = array<i64: 64, 16>}, {pipeline_mode = #tpu.pipeline_mode<synchronous>, transform_indices = @transform_5, window_bounds = array<i64: 1, 16>}, {transform_indices = @transform_6, window_bounds = array<i64: 32, 16>}]} {
    %c0 = arith.constant 0 : index
    %c0_0 = arith.constant 0 : index
    %0 = vector.load %arg1[%c0, %c0_0] : memref<32x33xi8, #tpu.memory_space<vmem>>, vector<32x33xi8>
    %1 = arith.extsi %0 : vector<32x33xi8> to vector<32x33xi32>
    %cst = arith.constant 0.000000e+00 : f32
    %2 = vector.broadcast %cst : f32 to vector<32x33xf32>
    %c0_i32 = arith.constant 0 : i32
    %3 = vector.broadcast %c0_i32 : i32 to vector<32x33xi32>
    %4 = arith.cmpi eq, %1, %3 : vector<32x33xi32>
    %c0_1 = arith.constant 0 : index
    %5 = memref.load %arg3[%c0_1] : memref<8xf32, #tpu.memory_space<smem>>
    %6 = vector.broadcast %5 : f32 to vector<32x33xf32>
    %7 = arith.select %4, %6, %2 : vector<32x33xi1>, vector<32x33xf32>
    %c1_i32 = arith.constant 1 : i32
    %8 = vector.broadcast %c1_i32 : i32 to vector<32x33xi32>
    %9 = arith.cmpi eq, %1, %8 : vector<32x33xi32>
    %c1 = arith.constant 1 : index
    %10 = memref.load %arg3[%c1] : memref<8xf32, #tpu.memory_space<smem>>
    %11 = vector.broadcast %10 : f32 to vector<32x33xf32>
    %12 = arith.select %9, %11, %7 : vector<32x33xi1>, vector<32x33xf32>
    %c2_i32 = arith.constant 2 : i32
    %13 = vector.broadcast %c2_i32 : i32 to vector<32x33xi32>
    %14 = arith.cmpi eq, %1, %13 : vector<32x33xi32>
    %c2 = arith.constant 2 : index
    %15 = memref.load %arg3[%c2] : memref<8xf32, #tpu.memory_space<smem>>
    %16 = vector.broadcast %15 : f32 to vector<32x33xf32>
    %17 = arith.select %14, %16, %12 : vector<32x33xi1>, vector<32x33xf32>
    %c3_i32 = arith.constant 3 : i32
    %18 = vector.broadcast %c3_i32 : i32 to vector<32x33xi32>
    %19 = arith.cmpi eq, %1, %18 : vector<32x33xi32>
    %c3 = arith.constant 3 : index
    %20 = memref.load %arg3[%c3] : memref<8xf32, #tpu.memory_space<smem>>
    %21 = vector.broadcast %20 : f32 to vector<32x33xf32>
    %22 = arith.select %19, %21, %17 : vector<32x33xi1>, vector<32x33xf32>
    %c4_i32 = arith.constant 4 : i32
    %23 = vector.broadcast %c4_i32 : i32 to vector<32x33xi32>
    %24 = arith.cmpi eq, %1, %23 : vector<32x33xi32>
    %c4 = arith.constant 4 : index
    %25 = memref.load %arg3[%c4] : memref<8xf32, #tpu.memory_space<smem>>
    %26 = vector.broadcast %25 : f32 to vector<32x33xf32>
    %27 = arith.select %24, %26, %22 : vector<32x33xi1>, vector<32x33xf32>
    %c5_i32 = arith.constant 5 : i32
    %28 = vector.broadcast %c5_i32 : i32 to vector<32x33xi32>
    %29 = arith.cmpi eq, %1, %28 : vector<32x33xi32>
    %c5 = arith.constant 5 : index
    %30 = memref.load %arg3[%c5] : memref<8xf32, #tpu.memory_space<smem>>
    %31 = vector.broadcast %30 : f32 to vector<32x33xf32>
    %32 = arith.select %29, %31, %27 : vector<32x33xi1>, vector<32x33xf32>
    %c6_i32 = arith.constant 6 : i32
    %33 = vector.broadcast %c6_i32 : i32 to vector<32x33xi32>
    %34 = arith.cmpi eq, %1, %33 : vector<32x33xi32>
    %c6 = arith.constant 6 : index
    %35 = memref.load %arg3[%c6] : memref<8xf32, #tpu.memory_space<smem>>
    %36 = vector.broadcast %35 : f32 to vector<32x33xf32>
    %37 = arith.select %34, %36, %32 : vector<32x33xi1>, vector<32x33xf32>
    %c7_i32 = arith.constant 7 : i32
    %38 = vector.broadcast %c7_i32 : i32 to vector<32x33xi32>
    %39 = arith.cmpi eq, %1, %38 : vector<32x33xi32>
    %c7 = arith.constant 7 : index
    %40 = memref.load %arg3[%c7] : memref<8xf32, #tpu.memory_space<smem>>
    %41 = vector.broadcast %40 : f32 to vector<32x33xf32>
    %42 = arith.select %39, %41, %37 : vector<32x33xi1>, vector<32x33xf32>
    %c0_2 = arith.constant 0 : index
    %c0_3 = arith.constant 0 : index
    %43 = vector.load %arg4[%c0_2, %c0_3] : memref<33x16xf32, #tpu.memory_space<vmem>>, vector<33x16xf32>
    %cst_4 = arith.constant dense<0.000000e+00> : vector<32x16xf32>
    %44 = tpu.matmul %42, %43, %cst_4 {dimension_numbers = #tpu.dot_dimension_numbers<[1], [0], [0], [1], [0, 0, 1, 1], [], []>} : vector<32x33xf32>, vector<33x16xf32>, vector<32x16xf32> -> vector<32x16xf32>
    %c0_5 = arith.constant 0 : index
    %c0_6 = arith.constant 0 : index
    %45 = vector.load %arg2[%c0_5, %c0_6] : memref<32x64xf32, #tpu.memory_space<vmem>>, vector<32x64xf32>
    %c0_7 = arith.constant 0 : index
    %c0_8 = arith.constant 0 : index
    %46 = vector.load %arg5[%c0_7, %c0_8] : memref<64x16xf32, #tpu.memory_space<vmem>>, vector<64x16xf32>
    %cst_9 = arith.constant dense<0.000000e+00> : vector<32x16xf32>
    %47 = tpu.matmul %45, %46, %cst_9 {dimension_numbers = #tpu.dot_dimension_numbers<[1], [0], [0], [1], [0, 0, 1, 1], [], []>} : vector<32x64xf32>, vector<64x16xf32>, vector<32x16xf32> -> vector<32x16xf32>
    %48 = arith.addf %44, %47 : vector<32x16xf32>
    %c0_10 = arith.constant 0 : index
    %c0_11 = arith.constant 0 : index
    %49 = vector.load %arg6[%c0_10, %c0_11] : memref<1x16xf32, #tpu.memory_space<vmem>>, vector<1x16xf32>
    %50 = vector.broadcast %49 : vector<1x16xf32> to vector<32x16xf32>
    %51 = arith.addf %48, %50 : vector<32x16xf32>
    %52 = arith.negf %51 : vector<32x16xf32>
    %53 = math.exp %52 : vector<32x16xf32>
    %cst_12 = arith.constant 1.000000e+00 : f32
    %54 = vector.broadcast %cst_12 : f32 to vector<32x16xf32>
    %55 = arith.addf %54, %53 : vector<32x16xf32>
    %56 = arith.divf %54, %55 : vector<32x16xf32>
    %c0_13 = arith.constant 0 : index
    %c0_14 = arith.constant 0 : index
    %57 = vector.load %arg7[%c0_13, %c0_14] : memref<32x16xf32, #tpu.memory_space<vmem>>, vector<32x16xf32>
    tpu.vector_store %arg7[%c0_13, %c0_14], %56 {strides = array<i32>} : memref<32x16xf32, #tpu.memory_space<vmem>>, vector<32x16xf32>,
    return
  }
  func.func @transform_0(%arg0: i32) -> (i32, i32) {
    %c0_i32 = arith.constant 0 : i32
    %c0_i32_0 = arith.constant 0 : i32
    return %arg0, %c0_i32 : i32, i32
  }
  func.func @transform_1(%arg0: i32) -> (i32, i32) {
    %c0_i32 = arith.constant 0 : i32
    %c0_i32_0 = arith.constant 0 : i32
    return %arg0, %c0_i32 : i32, i32
  }
  func.func @transform_2(%arg0: i32) -> i32 {
    %c0_i32 = arith.constant 0 : i32
    %c0_i32_0 = arith.constant 0 : i32
    return %c0_i32 : i32
  }
  func.func @transform_3(%arg0: i32) -> (i32, i32) {
    %c0_i32 = arith.constant 0 : i32
    %c0_i32_0 = arith.constant 0 : i32
    %c0_i32_1 = arith.constant 0 : i32
    return %c0_i32, %c0_i32_0 : i32, i32
  }
  func.func @transform_4(%arg0: i32) -> (i32, i32) {
    %c0_i32 = arith.constant 0 : i32
    %c0_i32_0 = arith.constant 0 : i32
    %c0_i32_1 = arith.constant 0 : i32
    return %c0_i32, %c0_i32_0 : i32, i32
  }
  func.func @transform_5(%arg0: i32) -> (i32, i32) {
    %c0_i32 = arith.constant 0 : i32
    %c0_i32_0 = arith.constant 0 : i32
    %c0_i32_1 = arith.constant 0 : i32
    return %c0_i32, %c0_i32_0 : i32, i32
  }
  func.func @transform_6(%arg0: i32) -> (i32, i32) {
    %c0_i32 = arith.constant 0 : i32
    %c0_i32_0 = arith.constant 0 : i32
    return %arg0, %c0_i32 : i32, i32
  }
}

</mosaic_0001>

<llo_original>
// kernel: tpu_custom_call.1
$region0: #{tpu_custom_call.1}
  #allocation0 [shape = 'u32[]', space=smem, size = 0x4, offset = 0x4, fixed_abs, tag = 'smem constant byte address 0x4 - core index']
  #allocation1 [shape = 'u32[144,128]{1,0:T(1,128)}', space=vmem, size = 0x12000, scoped, tag = 'internal scratch']
  %s0 = inlined_call_operand.vmem [shape: s8[32,33], index: 0, kind: input, shape index: {}]
  %s1 = inlined_call_operand.vmem [shape: f32[32,64], index: 1, kind: input, shape index: {}]
  %s2 = inlined_call_operand.vmem [shape: f32[8], index: 2, kind: input, shape index: {}]
  %s3 = inlined_call_operand.vmem [shape: f32[33,16], index: 3, kind: input, shape index: {}]
  %s4 = inlined_call_operand.vmem [shape: f32[64,16], index: 4, kind: input, shape index: {}]
  %s5 = inlined_call_operand.vmem [shape: f32[1,16], index: 5, kind: input, shape index: {}]
  %s6 = inlined_call_operand.vmem [shape: f32[32,16], index: 6, kind: output, shape index: {}]
  %s7 = sld [smem:[#allocation0]]
  $region38: #{tpu_custom_call.1} parent=0
    _
  %s9 = ssub.s32 1, %s7
  %s10 = scalar_select 0, %s9, %s7
  $region1: #{tpu_custom_call.1} parent=0
    #allocation2 [shape = 'u8[512]{0}', space=smem, size = 0x200, scoped, tag = 'input window, operand 2, single buffered']
    #allocation3 [shape = 's32[1]{0}', space=sflag, size = 0x4, scoped, tag = 'scoped memory for tpu_custom_call.1']
    %11 = vsyncpa [#allocation3], 0
    // Predicated region
    $region2: #{tpu_custom_call.1} parent=1 // pred_check
      _
    $region3: #{tpu_custom_call.1} parent=1 // pred_check_branch
      %13 = sbr.rel (0) target = $region5
    $region4: #{tpu_custom_call.1} parent=1 // pred_region
      _
    $region5: #{tpu_custom_call.1} parent=1 // pred_fallthru
      _
    // Predicated region
    $region6: #{tpu_custom_call.1} parent=1 // pred_check
      _
    $region7: #{tpu_custom_call.1} parent=1 // pred_check_branch
      %15 = sbr.rel (0) target = $region9
    $region8: #{tpu_custom_call.1} parent=1 // pred_region
      _
    $region9: #{tpu_custom_call.1} parent=1 // pred_fallthru
      _
    // Predicated region
    $region10: #{tpu_custom_call.1} parent=1 // pred_check
      _
    $region11: #{tpu_custom_call.1} parent=1 // pred_check_branch
      %17 = sbr.rel (0) target = $region13
    $region12: #{tpu_custom_call.1} parent=1 // pred_region
      %s19 = ssub.s32 16, 16
      %20 = vsyncadd [#allocation3], %s19
      %s22 = sshll.u32 %s2, 4
      %s23 = int_to_ptr.vmem [resolvable:$true] %s22
      %25 = dma.vmem_to_smem %s23, 16, [#allocation2], [#allocation3]
    $region13: #{tpu_custom_call.1} parent=1 // pred_fallthru
      _
    // Predicated region
    $region14: #{tpu_custom_call.1} parent=1 // pred_check
      _
    $region15: #{tpu_custom_call.1} parent=1 // pred_check_branch
      %27 = sbr.rel (0) target = $region17
    $region16: #{tpu_custom_call.1} parent=1 // pred_region
      _
    $region17: #{tpu_custom_call.1} parent=1 // pred_fallthru
      _
    // Predicated region
    $region18: #{tpu_custom_call.1} parent=1 // pred_check
      _
    $region19: #{tpu_custom_call.1} parent=1 // pred_check_branch
      %29 = sbr.rel (0) target = $region21
    $region20: #{tpu_custom_call.1} parent=1 // pred_region
      _
    $region21: #{tpu_custom_call.1} parent=1 // pred_fallthru
      _
    // Predicated region
    $region22: #{tpu_custom_call.1} parent=1 // pred_check
      _
    $region23: #{tpu_custom_call.1} parent=1 // pred_check_branch
      %31 = sbr.rel (0) target = $region25
    $region24: #{tpu_custom_call.1} parent=1 // pred_region
      _
    $region25: #{tpu_custom_call.1} parent=1 // pred_fallthru
      _
    // Predicated region
    $region26: #{tpu_custom_call.1} parent=1 // pred_check
      _
    $region27: #{tpu_custom_call.1} parent=1 // pred_check_branch
      %33 = sbr.rel (0) target = $region29
    $region28: #{tpu_custom_call.1} parent=1 // pred_region
      %34 = dma.done [#allocation3], 16
    $region29: #{tpu_custom_call.1} parent=1 // pred_fallthru
      _
    %35 = sfence
    %v36 = vld [vmem:[%s0] sm:$0xff]
    %v37 = vunpack.c.0.s8 %v36
    %v38 = vunpack.c.1.s8 %v36
    %v39 = vunpack.c.2.s8 %v36
    %v40 = vunpack.c.3.s8 %v36
    %vm41 = vcmp.eq.s32.totalorder %v37, 0
    %vm42 = vcmp.eq.s32.totalorder %v38, 0
    %vm43 = vcmp.eq.s32.totalorder %v39, 0
    %vm44 = vcmp.eq.s32.totalorder %v40, 0
    %s45 = sld [smem:[#allocation2]]
    %v46 = vstv %s45
    %v47 = vsel %vm41, %v46, 0.0
    %v48 = vsel %vm42, %v46, 0.0
    %v49 = vsel %vm43, %v46, 0.0
    %v50 = vsel %vm44, %v46, 0.0
    %vm51 = vcmp.eq.s32.totalorder %v37, 1
    %vm52 = vcmp.eq.s32.totalorder %v38, 1
    %vm53 = vcmp.eq.s32.totalorder %v39, 1
    %vm54 = vcmp.eq.s32.totalorder %v40, 1
    %s55 = sld [smem:[#allocation2 + $0x1]]
    %v56 = vstv %s55
    %v57 = vsel %vm51, %v56, %v47
    %v58 = vsel %vm52, %v56, %v48
    %v59 = vsel %vm53, %v56, %v49
    %v60 = vsel %vm54, %v56, %v50
    %vm61 = vcmp.eq.s32.totalorder %v37, 2
    %vm62 = vcmp.eq.s32.totalorder %v38, 2
    %vm63 = vcmp.eq.s32.totalorder %v39, 2
    %vm64 = vcmp.eq.s32.totalorder %v40, 2
    %s65 = sld [smem:[#allocation2 + $0x2]]
    %v66 = vstv %s65
    %v67 = vsel %vm61, %v66, %v57
    %v68 = vsel %vm62, %v66, %v58
    %v69 = vsel %vm63, %v66, %v59
    %v70 = vsel %vm64, %v66, %v60
    %vm71 = vcmp.eq.s32.totalorder %v37, 3
    %vm72 = vcmp.eq.s32.totalorder %v38, 3
    %vm73 = vcmp.eq.s32.totalorder %v39, 3
    %vm74 = vcmp.eq.s32.totalorder %v40, 3
    %s75 = sld [smem:[#allocation2 + $0x3]]
    %v76 = vstv %s75
    %v77 = vsel %vm71, %v76, %v67
    %v78 = vsel %vm72, %v76, %v68
    %v79 = vsel %vm73, %v76, %v69
    %v80 = vsel %vm74, %v76, %v70
    %vm81 = vcmp.eq.s32.totalorder %v37, 4
    %vm82 = vcmp.eq.s32.totalorder %v38, 4
    %vm83 = vcmp.eq.s32.totalorder %v39, 4
    %vm84 = vcmp.eq.s32.totalorder %v40, 4
    %s85 = sld [smem:[#allocation2 + $0x4]]
    %v86 = vstv %s85
    %v87 = vsel %vm81, %v86, %v77
    %v88 = vsel %vm82, %v86, %v78
    %v89 = vsel %vm83, %v86, %v79
    %v90 = vsel %vm84, %v86, %v80
    %vm91 = vcmp.eq.s32.totalorder %v37, 5
    %vm92 = vcmp.eq.s32.totalorder %v38, 5
    %vm93 = vcmp.eq.s32.totalorder %v39, 5
    %vm94 = vcmp.eq.s32.totalorder %v40, 5
    %s95 = sld [smem:[#allocation2 + $0x5]]
    %v96 = vstv %s95
    %v97 = vsel %vm91, %v96, %v87
    %v98 = vsel %vm92, %v96, %v88
    %v99 = vsel %vm93, %v96, %v89
    %v100 = vsel %vm94, %v96, %v90
    %vm101 = vcmp.eq.s32.totalorder %v37, 6
    %vm102 = vcmp.eq.s32.totalorder %v38, 6
    %vm103 = vcmp.eq.s32.totalorder %v39, 6
    %vm104 = vcmp.eq.s32.totalorder %v40, 6
    %s105 = sld [smem:[#allocation2 + $0x6]]
    %v106 = vstv %s105
    %v107 = vsel %vm101, %v106, %v97
    %v108 = vsel %vm102, %v106, %v98
    %v109 = vsel %vm103, %v106, %v99
    %v110 = vsel %vm104, %v106, %v100
    %vm111 = vcmp.eq.s32.totalorder %v37, 7
    %vm112 = vcmp.eq.s32.totalorder %v38, 7
    %vm113 = vcmp.eq.s32.totalorder %v39, 7
    %vm114 = vcmp.eq.s32.totalorder %v40, 7
    %s115 = sld [smem:[#allocation2 + $0x7]]
    %v116 = vstv %s115
    %v117 = vsel %vm111, %v116, %v107
    %v118 = vsel %vm112, %v116, %v108
    %v119 = vsel %vm113, %v116, %v109
    %v120 = vsel %vm114, %v116, %v110
    %v121 = vld [vmem:[%s3] sm:$0xff]
    %v122 = vld [vmem:[%s3 + $0x8] sm:$0xff]
    %v123 = vld [vmem:[%s3 + $0x10] sm:$0xff]
    %v124 = vld [vmem:[%s3 + $0x18] sm:$0xff]
    %v125 = vld [vmem:[%s3 + $0x20] sm:$0x1]
    %v126 = vld [vmem:[%s1] sm:$0xff]
    %v127 = vld [vmem:[%s1 + $0x8] sm:$0xff]
    %v128 = vld [vmem:[%s1 + $0x10] sm:$0xff]
    %v129 = vld [vmem:[%s1 + $0x18] sm:$0xff]
    %v130 = vld [vmem:[%s4] sm:$0xff]
    %v131 = vld [vmem:[%s4 + $0x8] sm:$0xff]
    %v132 = vld [vmem:[%s4 + $0x10] sm:$0xff]
    %v133 = vld [vmem:[%s4 + $0x18] sm:$0xff]
    %v134 = vld [vmem:[%s4 + $0x20] sm:$0xff]
    %v135 = vld [vmem:[%s4 + $0x28] sm:$0xff]
    %v136 = vld [vmem:[%s4 + $0x30] sm:$0xff]
    %v137 = vld [vmem:[%s4 + $0x38] sm:$0xff]
    %vm138 = vcmask 523264
    %v140 = vsel %vm138, %v126, 0
    %v143 = vsel %vm138, %v127, 0
    %v146 = vsel %vm138, %v128, 0
    %v149 = vsel %vm138, %v129, 0
    %151 = vmatprep.subr.mxu0 0.0
    %152 = vmatpush1.msra.mxu0 %v130
    %153 = vmatprep.subr.mxu0 0.0
    %154 = vmatpush1.msra.mxu0 %v131
    %155 = vmatprep.subr.mxu0 0.0
    %156 = vmatpush1.msra.mxu0 %v132
    %157 = vmatprep.subr.mxu0 0.0
    %158 = vmatpush1.msra.mxu0 %v133
    %159 = vmatprep.subr.mxu0 0.0
    %160 = vmatpush1.msra.mxu0 %v134
    %161 = vmatprep.subr.mxu0 0.0
    %162 = vmatpush1.msra.mxu0 %v135
    %163 = vmatprep.subr.mxu0 0.0
    %164 = vmatpush1.msra.mxu0 %v136
    %165 = vmatprep.subr.mxu0 0.0
    %166 = vmatpush1.msra.mxu0 %v137
    %167 = vmatprep.subr.mxu0 0.0
    %168 = vmatpush1.msra.mxu0 0.0
    %169 = vmatprep.subr.mxu0 0.0
    %170 = vmatpush1.msra.mxu0 0.0
    %171 = vmatprep.subr.mxu0 0.0
    %172 = vmatpush1.msra.mxu0 0.0
    %173 = vmatprep.subr.mxu0 0.0
    %174 = vmatpush1.msra.mxu0 0.0
    %175 = vmatprep.subr.mxu0 0.0
    %176 = vmatpush1.msra.mxu0 0.0
    %177 = vmatprep.subr.mxu0 0.0
    %178 = vmatpush1.msra.mxu0 0.0
    %179 = vmatprep.subr.mxu0 0.0
    %180 = vmatpush1.msra.mxu0 0.0
    %181 = vmatprep.subr.mxu0 0.0
    %182 = vmatpush1.msra.mxu0 0.0
    %183 = vmatprep.subr.mxu0 0.0
    %184 = vmatpush1.msra.mxu0 0.0
    %185 = vmatprep.subr.mxu0 0.0
    %186 = vmatpush1.msra.mxu0 0.0
    %187 = vmatprep.subr.mxu0 0.0
    %188 = vmatpush1.msra.mxu0 0.0
    %189 = vmatprep.subr.mxu0 0.0
    %190 = vmatpush1.msra.mxu0 0.0
    %191 = vmatprep.subr.mxu0 0.0
    %192 = vmatpush1.msra.mxu0 0.0
    %193 = vmatprep.subr.mxu0 0.0
    %194 = vmatpush1.msra.mxu0 0.0
    %195 = vmatprep.subr.mxu0 0.0
    %196 = vmatpush1.msra.mxu0 0.0
    %197 = vmatprep.subr.mxu0 0.0
    %198 = vmatpush1.msra.mxu0 0.0
    %199 = vmatprep.subr.mxu0 0.0
    %200 = vmatpush1.msra.mxu0 0.0
    %201 = vmatprep.subr.mxu0 0.0
    %202 = vmatpush1.msra.mxu0 0.0
    %203 = vmatprep.subr.mxu0 0.0
    %204 = vmatpush1.msra.mxu0 0.0
    %205 = vmatprep.subr.mxu0 0.0
    %206 = vmatpush1.msra.mxu0 0.0
    %207 = vmatprep.subr.mxu0 0.0
    %208 = vmatpush1.msra.mxu0 0.0
    %209 = vmatprep.subr.mxu0 0.0
    %210 = vmatpush1.msra.mxu0 0.0
    %211 = vmatprep.subr.mxu0 0.0
    %212 = vmatpush1.msra.mxu0 0.0
    %213 = vmatprep.subr.mxu0 0.0
    %214 = vmatpush1.msra.mxu0 0.0
    %215 = vmatprep.mubr.f32.mxu0 0.0
    %216 = vmatmul.mubr.f32.gmra.mrb[0].mxu0 %v140
    %v217 = vpop.f32.mrb[0].mxu0
    %v218 = vadd.f32 0.0, %v217
    %v219 = vpop.f32.mrb[0].mxu0
    %220 = vmatprep.mubr.f32.mxu0 0.0
    %221 = vmatmul.mubr.f32.gmra.mrb[0].mxu0 %v143
    %v222 = vpop.f32.mrb[0].mxu0
    %v223 = vadd.f32 0.0, %v222
    %v224 = vpop.f32.mrb[0].mxu0
    %225 = vmatprep.mubr.f32.mxu0 0.0
    %226 = vmatmul.mubr.f32.gmra.mrb[0].mxu0 %v146
    %v227 = vpop.f32.mrb[0].mxu0
    %v228 = vadd.f32 0.0, %v227
    %v229 = vpop.f32.mrb[0].mxu0
    %230 = vmatprep.mubr.f32.mxu0 0.0
    %231 = vmatmul.mubr.f32.gmra.mrb[0].mxu0 %v149
    %v232 = vpop.f32.mrb[0].mxu0
    %v233 = vadd.f32 0.0, %v232
    %v234 = vpop.f32.mrb[0].mxu0
    %235 = vdwg.mxu0
    %vm236 = vcmask 269312
    %v238 = vsel %vm236, %v117, 0
    %v241 = vsel %vm236, %v118, 0
    %v244 = vsel %vm236, %v119, 0
    %v247 = vsel %vm236, %v120, 0
    %vm249 = vcmask 1040384
    %v251 = vsel %vm249, %v125, 0
    %253 = vmatprep.subr.mxu0 0.0
    %254 = vmatpush1.msra.mxu0 %v121
    %255 = vmatprep.subr.mxu0 0.0
    %256 = vmatpush1.msra.mxu0 %v122
    %257 = vmatprep.subr.mxu0 0.0
    %258 = vmatpush1.msra.mxu0 %v123
    %259 = vmatprep.subr.mxu0 0.0
    %260 = vmatpush1.msra.mxu0 %v124
    %261 = vmatprep.subr.mxu0 0.0
    %262 = vmatpush1.msra.mxu0 %v251
    %263 = vmatprep.subr.mxu0 0.0
    %264 = vmatpush1.msra.mxu0 0.0
    %265 = vmatprep.subr.mxu0 0.0
    %266 = vmatpush1.msra.mxu0 0.0
    %267 = vmatprep.subr.mxu0 0.0
    %268 = vmatpush1.msra.mxu0 0.0
    %269 = vmatprep.subr.mxu0 0.0
    %270 = vmatpush1.msra.mxu0 0.0
    %271 = vmatprep.subr.mxu0 0.0
    %272 = vmatpush1.msra.mxu0 0.0
    %273 = vmatprep.subr.mxu0 0.0
    %274 = vmatpush1.msra.mxu0 0.0
    %275 = vmatprep.subr.mxu0 0.0
    %276 = vmatpush1.msra.mxu0 0.0
    %277 = vmatprep.subr.mxu0 0.0
    %278 = vmatpush1.msra.mxu0 0.0
    %279 = vmatprep.subr.mxu0 0.0
    %280 = vmatpush1.msra.mxu0 0.0
    %281 = vmatprep.subr.mxu0 0.0
    %282 = vmatpush1.msra.mxu0 0.0
    %283 = vmatprep.subr.mxu0 0.0
    %284 = vmatpush1.msra.mxu0 0.0
    %285 = vmatprep.subr.mxu0 0.0
    %286 = vmatpush1.msra.mxu0 0.0
    %287 = vmatprep.subr.mxu0 0.0
    %288 = vmatpush1.msra.mxu0 0.0
    %289 = vmatprep.subr.mxu0 0.0
    %290 = vmatpush1.msra.mxu0 0.0
    %291 = vmatprep.subr.mxu0 0.0
    %292 = vmatpush1.msra.mxu0 0.0
    %293 = vmatprep.subr.mxu0 0.0
    %294 = vmatpush1.msra.mxu0 0.0
    %295 = vmatprep.subr.mxu0 0.0
    %296 = vmatpush1.msra.mxu0 0.0
    %297 = vmatprep.subr.mxu0 0.0
    %298 = vmatpush1.msra.mxu0 0.0
    %299 = vmatprep.subr.mxu0 0.0
    %300 = vmatpush1.msra.mxu0 0.0
    %301 = vmatprep.subr.mxu0 0.0
    %302 = vmatpush1.msra.mxu0 0.0
    %303 = vmatprep.subr.mxu0 0.0
    %304 = vmatpush1.msra.mxu0 0.0
    %305 = vmatprep.subr.mxu0 0.0
    %306 = vmatpush1.msra.mxu0 0.0
    %307 = vmatprep.subr.mxu0 0.0
    %308 = vmatpush1.msra.mxu0 0.0
    %309 = vmatprep.subr.mxu0 0.0
    %310 = vmatpush1.msra.mxu0 0.0
    %311 = vmatprep.subr.mxu0 0.0
    %312 = vmatpush1.msra.mxu0 0.0
    %313 = vmatprep.subr.mxu0 0.0
    %314 = vmatpush1.msra.mxu0 0.0
    %315 = vmatprep.subr.mxu0 0.0
    %316 = vmatpush1.msra.mxu0 0.0
    %317 = vmatprep.mubr.f32.mxu0 0.0
    %318 = vmatmul.mubr.f32.gmra.mrb[0].mxu0 %v238
    %v319 = vpop.f32.mrb[0].mxu0
    %v320 = vadd.f32 %v218, %v319
    %v321 = vpop.f32.mrb[0].mxu0
    %322 = vmatprep.mubr.f32.mxu0 0.0
    %323 = vmatmul.mubr.f32.gmra.mrb[0].mxu0 %v241
    %v324 = vpop.f32.mrb[0].mxu0
    %v325 = vadd.f32 %v223, %v324
    %v326 = vpop.f32.mrb[0].mxu0
    %327 = vmatprep.mubr.f32.mxu0 0.0
    %328 = vmatmul.mubr.f32.gmra.mrb[0].mxu0 %v244
    %v329 = vpop.f32.mrb[0].mxu0
    %v330 = vadd.f32 %v228, %v329
    %v331 = vpop.f32.mrb[0].mxu0
    %332 = vmatprep.mubr.f32.mxu0 0.0
    %333 = vmatmul.mubr.f32.gmra.mrb[0].mxu0 %v247
    %v334 = vpop.f32.mrb[0].mxu0
    %v335 = vadd.f32 %v233, %v334
    %v336 = vpop.f32.mrb[0].mxu0
    %337 = vdwg.mxu0
    %v338 = vld [vmem:[%s5] sm:$0x1]
    %v340 = vlaneseq
    %v341 = vshrl.u32 %v340, 7
    %v342 = vsub.s32 0, %v341
    %v343 = vrot.slane %v338, %v342
    %v345 = vadd.f32 %v320, %v343
    %v346 = vadd.f32 %v325, %v343
    %v347 = vadd.f32 %v330, %v343
    %v348 = vadd.f32 %v335, %v343
    %v349 = vxor.u32 %v345, 2147483648
    %v350 = vxor.u32 %v346, 2147483648
    %v351 = vxor.u32 %v347, 2147483648
    %v352 = vxor.u32 %v348, 2147483648
    %v353 = vmul.f32 %v349, 1.442695
    %v354 = vpow.pop %v353
    %v355 = vmul.f32 %v350, 1.442695
    %v356 = vpow.pop %v355
    %v357 = vmul.f32 %v351, 1.442695
    %v358 = vpow.pop %v357
    %v359 = vmul.f32 %v352, 1.442695
    %v360 = vpow.pop %v359
    %v361 = vadd.f32 %v354, 1.0
    %v362 = vadd.f32 %v356, 1.0
    %v363 = vadd.f32 %v358, 1.0
    %v364 = vadd.f32 %v360, 1.0
    %v365 = vrcp.pop %v361
    %v366 = vmul.f32 1.0, %v365
    %v367 = vrcp.pop %v362
    %v368 = vmul.f32 1.0, %v367
    %v369 = vrcp.pop %v363
    %v370 = vmul.f32 1.0, %v369
    %v371 = vrcp.pop %v364
    %v372 = vmul.f32 1.0, %v371
    %vm373 = vcmask 130048
    %374 = vst.msk [vmem:[%s6] sm:$0xff] %vm373, %v366
    %375 = vst.msk [vmem:[%s6 + $0x8] sm:$0xff] %vm373, %v368
    %376 = vst.msk [vmem:[%s6 + $0x10] sm:$0xff] %vm373, %v370
    %377 = vst.msk [vmem:[%s6 + $0x18] sm:$0xff] %vm373, %v372
    // Predicated region
    $region30: #{tpu_custom_call.1} parent=1 // pred_check
      _
    $region31: #{tpu_custom_call.1} parent=1 // pred_check_branch
      %379 = sbr.rel (0) target = $region33
    $region32: #{tpu_custom_call.1} parent=1 // pred_region
      _
    $region33: #{tpu_custom_call.1} parent=1 // pred_fallthru
      _
    // Predicated region
    $region34: #{tpu_custom_call.1} parent=1 // pred_check
      _
    $region35: #{tpu_custom_call.1} parent=1 // pred_check_branch
      %381 = sbr.rel (0) target = $region37
    $region36: #{tpu_custom_call.1} parent=1 // pred_region
      _
    $region37: #{tpu_custom_call.1} parent=1 // pred_fallthru
      _
    %382 = vsyncpa [#allocation3], 1

</llo_original>
